<compile_context>
chip_gen: v6e
topology: v6e:2x2x1
jax: 0.10.0
libtpu: 0.0.40
codegen_flags: <defaults>
</compile_context>

<pallas_src>
import functools

import jax
import jax.numpy as jnp
import numpy as np
from jax.experimental import pallas as pl
from jax.experimental.pallas import tpu as pltpu


_BIG_DIST = 1.0e30  # sentinel "distance" for padded codebook rows


def _round_up(v, m):
    return ((v + m - 1) // m) * m


def _vmem_capacity_bytes():
    # Trace-time hardware query; conservative fallback if unavailable.
    try:
        return int(pltpu.get_tpu_info().vmem_capacity_bytes)
    except Exception:
        return 64 * 1024 * 1024


def _vq_fused_kernel(x_ref, edist_ref, esq_ref, egather_ref, out_ref, lsum_ref,
                     *, n_rows, row_tile, dist_dtype):
    """Small/medium-K path: argmin + one-hot gather + ST output + loss partials."""
    x = x_ref[...]                                                  # (T, Dp)

    # Distances up to a per-row constant: ||e||^2 - 2 x.e.  The -2 is folded
    # into edist (pre-transposed to (Dp, Kp) in the wrapper), so the kernel
    # emits a single MXU matmul and one VPU add, no transpose.
    dots = jnp.dot(x.astype(dist_dtype), edist_ref[...],
                   preferred_element_type=jnp.float32)              # (T, Kp)
    d2 = esq_ref[...] + dots                                        # (T, Kp)

    # First-occurrence argmin (matches torch.argmin tie-breaking).
    col = jax.lax.broadcasted_iota(jnp.int32, d2.shape, 1)
    min_d = jnp.min(d2, axis=-1, keepdims=True)                     # (T, 1)
    big = jnp.array(jnp.iinfo(jnp.int32).max, jnp.int32)
    idx = jnp.min(jnp.where(d2 <= min_d, col, big), axis=-1, keepdims=True)

    # Exact codebook rows via one-hot f32 matmul (cheap for small Kp).
    onehot = (col == idx).astype(jnp.float32)                       # (T, Kp)
    q = jnp.dot(onehot, egather_ref[...], preferred_element_type=jnp.float32)

    xf = x.astype(jnp.float32)
    diff = q - xf
    # Straight-through forward value: x + (q - x).
    out_ref[...] = (xf + diff).astype(out_ref.dtype)

    # Per-tile partial sum of (q - x)^2.  Padded columns are zero in both q
    # and x (no contribution); padded rows are masked out here.
    row = (jax.lax.broadcasted_iota(jnp.int32, (row_tile, 1), 0)
           + pl.program_id(0) * row_tile)
    valid = (row < n_rows).astype(jnp.float32)                      # (T, 1)
    part = jnp.sum(diff * diff * valid)
    lsum_ref[...] = jnp.full((8, 128), part, jnp.float32)


def _vq_index_kernel(x_ref, edist_ref, esq_ref, idx_ref, *, dist_dtype):
    """Large-K path: emit int32 indices only (gather/loss done by XLA)."""
    dots = jnp.dot(x_ref[...].astype(dist_dtype), edist_ref[...],
                   preferred_element_type=jnp.float32)              # (T, Kp)
    d2 = esq_ref[...] + dots
    col = jax.lax.broadcasted_iota(jnp.int32, d2.shape, 1)
    min_d = jnp.min(d2, axis=-1, keepdims=True)
    big = jnp.array(jnp.iinfo(jnp.int32).max, jnp.int32)
    idx_ref[...] = jnp.min(jnp.where(d2 <= min_d, col, big),
                           axis=-1, keepdims=True)                  # (T, 1)


@functools.partial(
    jax.jit,
    static_argnames=("commitment_cost", "row_tile", "dist_dtype",
                     "gather_in_kernel"),
)
def vector_quantizer_forward(x, embedding, commitment_cost=0.25, row_tile=None,
                             dist_dtype=None, gather_in_kernel=None):
    """Forward pass of VectorQuantizer.

    x:         (B, S, D) float
    embedding: (K, D)    float codebook
    returns (quantized (B, S, D), loss scalar)
    """
    B, S, D = x.shape
    K, De = embedding.shape
    assert D == De
    N = B * S

    Dp = _round_up(max(D, 128), 128)
    Kp = _round_up(max(K, 128), 128)

    # ---- static policy decisions -------------------------------------------
    if dist_dtype is None:
        # bf16 distances only when the codebook is big enough that the MXU
        # matmul dominates (argmin needs only relative ordering).
        dist_dtype = jnp.bfloat16 if Kp >= 512 else jnp.float32
    if gather_in_kernel is None:
        # For big codebooks the one-hot gather matmul doubles MXU work; emit
        # indices and gather in the wrapper instead.
        gather_in_kernel = Kp < 2048

    itemsize_x = x.dtype.itemsize
    dist_bytes = np.dtype(dist_dtype).itemsize

    def _vmem_estimate(t):
        est = 2 * t * Dp * itemsize_x          # x input blocks (double-buffered)
        est += 2 * Dp * Kp * dist_bytes        # resident (-2E)^T distance codebook
        est += 2 * 8 * Kp * 4                  # resident ||e||^2 row
        est += 6 * t * Kp * 4                  # live (t, Kp) temporaries
        if gather_in_kernel:
            est += 2 * Kp * Dp * 4             # resident f32 gather codebook
            est += 2 * t * Dp * itemsize_x     # ST output blocks
            est += 2 * t * Dp * 4              # q / diff f32 temporaries
            est += 2 * 8 * 128 * 4             # loss-partial output blocks
        else:
            est += 2 * t * 128 * 4             # idx output blocks
        return est

    cap = _vmem_capacity_bytes()

    if row_tile is not None:
        tile = _round_up(max(int(row_tile), 8), 8)
    else:
        # Big tiles amortize the ~0.35us/grid-step overhead (v5e/v6e 128 MiB
        # VMEM); shrink when (tile, Kp) temporaries would crowd v7x's 64 MiB.
        tile = 1024 if Kp <= 512 else (512 if Kp <= 2048 else 256)
        while tile > 256 and _vmem_estimate(tile) > int(0.7 * cap):
            tile //= 2
    # Keep >= 2 grid steps when the row count allows it so the "parallel"
    # axis can be sharded across v7x's two TensorCores.
    if N > 8:
        tile = min(tile, _round_up((N + 1) // 2, 8))
    tile = max(tile, 8)

    Np = _round_up(N, tile)
    num_tiles = Np // tile

    vmem_limit = int(min(max(_vmem_estimate(tile) + (8 << 20), 32 << 20),
                         int(0.9 * cap)))

    # ---- operand preparation (codebook-sized, cheap) ------------------------
    flat_x = x.reshape(N, D)
    emb_f32 = embedding.astype(jnp.float32)

    # Pre-transposed distance codebook with -2 folded in (exact scaling), so
    # the kernel computes d2 = ||e||^2 + x @ (-2 E)^T with no in-kernel .T.
    e_dist = jnp.zeros((Dp, Kp), dist_dtype).at[:D, :K].set(
        (-2.0 * emb_f32).T.astype(dist_dtype))

    # Hoisted ||e||^2; padded codewords get a huge sentinel so they never win.
    e_sq = jnp.full((1, Kp), _BIG_DIST, jnp.float32).at[0, :K].set(
        jnp.sum(emb_f32 * emb_f32, axis=-1))

    # Skip the activation padding copy entirely when the slab is aligned.
    pad_rows = Np != N
    pad_cols = Dp != D
    if pad_rows or pad_cols:
        x_in = jnp.zeros((Np, Dp), x.dtype).at[:N, :D].set(flat_x)
    else:
        x_in = flat_x

    compiler_params = pltpu.CompilerParams(
        dimension_semantics=("parallel",),     # no cross-step carries
        vmem_limit_bytes=vmem_limit,
    )

    if gather_in_kernel:
        e_gather = jnp.zeros((Kp, Dp), jnp.float32).at[:K, :D].set(emb_f32)
        out_pad, lsum = pl.pallas_call(
            functools.partial(_vq_fused_kernel, n_rows=N, row_tile=tile,
                              dist_dtype=dist_dtype),
            out_shape=(
                jax.ShapeDtypeStruct((Np, Dp), x.dtype),
                jax.ShapeDtypeStruct((num_tiles * 8, 128), jnp.float32),
            ),
            grid_spec=pltpu.PrefetchScalarGridSpec(
                num_scalar_prefetch=0,
                grid=(num_tiles,),
                in_specs=[
                    pl.BlockSpec((tile, Dp), lambda i: (i, 0)),   # x row tile
                    pl.BlockSpec((Dp, Kp), lambda i: (0, 0)),     # (-2 E)^T
                    pl.BlockSpec((1, Kp), lambda i: (0, 0)),      # ||e||^2
                    pl.BlockSpec((Kp, Dp), lambda i: (0, 0)),     # gather codebook
                ],
                out_specs=[
                    pl.BlockSpec((tile, Dp), lambda i: (i, 0)),   # ST output
                    pl.BlockSpec((8, 128), lambda i: (i, 0)),     # loss partials
                ],
            ),
            compiler_params=compiler_params,
        )(x_in, e_dist, e_sq, e_gather)

        quant_st = out_pad[:N, :D] if (pad_rows or pad_cols) else out_pad
        # Each (8,128) partial block replicates its tile's sum 1024 times.
        mse = jnp.sum(lsum) / (1024.0 * N * D)
    else:
        idx_pad = pl.pallas_call(
            functools.partial(_vq_index_kernel, dist_dtype=dist_dtype),
            out_shape=jax.ShapeDtypeStruct((Np, 1), jnp.int32),
            grid_spec=pltpu.PrefetchScalarGridSpec(
                num_scalar_prefetch=0,
                grid=(num_tiles,),
                in_specs=[
                    pl.BlockSpec((tile, Dp), lambda i: (i, 0)),   # x row tile
                    pl.BlockSpec((Dp, Kp), lambda i: (0, 0)),     # (-2 E)^T
                    pl.BlockSpec((1, Kp), lambda i: (0, 0)),      # ||e||^2
                ],
                out_specs=pl.BlockSpec((tile, 1), lambda i: (i, 0)),
            ),
            compiler_params=compiler_params,
        )(x_in, e_dist, e_sq)

        idx = idx_pad[:N, 0]
        q = jnp.take(emb_f32, idx, axis=0)                         # exact rows
        xf = flat_x.astype(jnp.float32)
        diff = q - xf
        quant_st = (xf + diff).astype(x.dtype)                     # ST forward
        mse = jnp.mean(diff * diff)

    # e_latent_loss and q_latent_loss share the same forward value (detach only
    # affects gradients): loss = q_latent + commitment_cost * e_latent.
    loss = (1.0 + commitment_cost) * mse
    # TODO(synk): training-time gradients (straight-through estimator and the
    # two detach'd MSE terms for codebook vs encoder) need a custom_vjp; this
    # implements the forward pass only.
    quantized = quant_st.reshape(B, S, D)
    return quantized, loss


def _reference_forward(x, embedding, commitment_cost=0.25):
    """Plain-JAX reference mirroring the PyTorch module (forward values)."""
    B, S, D = x.shape
    flat_x = x.reshape(B * S, D)
    d2 = (
        jnp.sum(flat_x * flat_x, axis=1, keepdims=True)
        - 2.0 * flat_x @ embedding.T
        + jnp.sum(embedding * embedding, axis=1)[None, :]
    )
    idx = jnp.argmin(d2, axis=1)
    quant = embedding[idx].reshape(B, S, D)
    e_latent = jnp.mean((quant - x) ** 2)
    q_latent = jnp.mean((quant - x) ** 2)
    loss = q_latent + commitment_cost * e_latent
    quant = x + (quant - x)
    return quant, loss


if __name__ == "__main__":
    B, S, D = 2, 8, 32
    num_embeddings = 16
    commitment_cost = 0.25

    key = jax.random.PRNGKey(0)
    kx, ke, kp, ki = jax.random.split(key, 4)
    x = jax.random.normal(kx, (B, S, D), dtype=jnp.float32)
    # nn.init.uniform_(weight, -0.1, 0.1), deterministic
    embedding = jax.random.uniform(
        ke, (num_embeddings, D), minval=-0.1, maxval=0.1, dtype=jnp.float32
    )

    # Path 1: default policy (f32 distances, in-kernel gather, fused loss).
    quantized, loss = vector_quantizer_forward(
        x, embedding, commitment_cost=commitment_cost
    )
    quantized = jax.block_until_ready(quantized)
    loss = jax.block_until_ready(loss)
    q_ref, l_ref = _reference_forward(x, embedding, commitment_cost)
    assert jnp.allclose(quantized, q_ref, atol=1e-5, rtol=1e-5)
    assert jnp.allclose(loss, l_ref, atol=1e-5, rtol=1e-5)

    # Path 1b: ragged row count (exercises row padding + masked loss partials).
    x_odd = x[:, :5]
    q_odd, l_odd = vector_quantizer_forward(
        x_odd, embedding, commitment_cost=commitment_cost
    )
    q_odd = jax.block_until_ready(q_odd)
    q_ref_odd, l_ref_odd = _reference_forward(x_odd, embedding, commitment_cost)
    assert jnp.allclose(q_odd, q_ref_odd, atol=1e-5, rtol=1e-5)
    assert jnp.allclose(l_odd, l_ref_odd, atol=1e-5, rtol=1e-5)

    # Path 2: bf16 distances + index-only kernel (large-K path), exercised on a
    # lane-aligned D=128 problem whose nearest codeword has a wide margin so
    # bf16 rounding cannot flip the argmin.
    D2 = 128
    emb2 = jax.random.uniform(
        ke, (num_embeddings, D2), minval=-0.1, maxval=0.1, dtype=jnp.float32
    )
    base = jax.random.randint(ki, (B * S,), 0, num_embeddings)
    x2 = (emb2[base] + 0.001 * jax.random.normal(kp, (B * S, D2))).reshape(B, S, D2)
    quantized2, loss2 = vector_quantizer_forward(
        x2, emb2, commitment_cost=commitment_cost,
        dist_dtype=jnp.bfloat16, gather_in_kernel=False,
    )
    quantized2 = jax.block_until_ready(quantized2)
    loss2 = jax.block_until_ready(loss2)
    q_ref2, l_ref2 = _reference_forward(x2, emb2, commitment_cost)
    assert jnp.allclose(quantized2, q_ref2, atol=1e-5, rtol=1e-5)
    assert jnp.allclose(loss2, l_ref2, atol=1e-5, rtol=1e-5)

    print("KERNEL_OK")
</pallas_src>

<mosaic_0001>
module attributes {stable_mosaic.version = 11 : i64} {
  func.func @_vq_fused_kernel(%arg0: i32, %arg1: memref<8x128xf32, #tpu.memory_space<vmem>>, %arg2: memref<128x128xf32, #tpu.memory_space<vmem>>, %arg3: memref<1x128xf32, #tpu.memory_space<vmem>>, %arg4: memref<128x128xf32, #tpu.memory_space<vmem>>, %arg5: memref<8x128xf32, #tpu.memory_space<vmem>>, %arg6: memref<8x128xf32, #tpu.memory_space<vmem>>) attributes {dimension_semantics = [#tpu.dimension_semantics<parallel>], iteration_bounds = array<i64: 2>, scalar_prefetch = 0 : i64, scratch_operands = 0 : i64, tpu.core_type = #tpu.core_type<tc>, window_params = [{transform_indices = @transform_0, window_bounds = array<i64: 8, 128>}, {pipeline_mode = #tpu.pipeline_mode<synchronous>, transform_indices = @transform_1, window_bounds = array<i64: 128, 128>}, {pipeline_mode = #tpu.pipeline_mode<synchronous>, transform_indices = @transform_2, window_bounds = array<i64: 1, 128>}, {pipeline_mode = #tpu.pipeline_mode<synchronous>, transform_indices = @transform_3, window_bounds = array<i64: 128, 128>}, {transform_indices = @transform_4, window_bounds = array<i64: 8, 128>}, {transform_indices = @transform_5, window_bounds = array<i64: 8, 128>}]} {
    %c0 = arith.constant 0 : index
    %c0_0 = arith.constant 0 : index
    %0 = vector.load %arg1[%c0, %c0_0] : memref<8x128xf32, #tpu.memory_space<vmem>>, vector<8x128xf32>
    %c0_1 = arith.constant 0 : index
    %c0_2 = arith.constant 0 : index
    %1 = vector.load %arg2[%c0_1, %c0_2] : memref<128x128xf32, #tpu.memory_space<vmem>>, vector<128x128xf32>
    %cst = arith.constant dense<0.000000e+00> : vector<8x128xf32>
    %2 = tpu.matmul %0, %1, %cst {dimension_numbers = #tpu.dot_dimension_numbers<[1], [0], [0], [1], [0, 0, 1, 1], [], []>} : vector<8x128xf32>, vector<128x128xf32>, vector<8x128xf32> -> vector<8x128xf32>
    %c0_3 = arith.constant 0 : index
    %c0_4 = arith.constant 0 : index
    %3 = vector.load %arg3[%c0_3, %c0_4] : memref<1x128xf32, #tpu.memory_space<vmem>>, vector<1x128xf32>
    %4 = vector.broadcast %3 : vector<1x128xf32> to vector<8x128xf32>
    %5 = arith.addf %4, %2 : vector<8x128xf32>
    %6 = tpu.iota {dimensions = array<i32: 1>} : vector<8x128xi32>
    %cst_5 = arith.constant dense<0x7F800000> : vector<8xf32>
    %7 = vector.multi_reduction <minimumf>, %5, %cst_5 [1] : vector<8x128xf32> to vector<8xf32>
    %8 = vector.shape_cast %7 : vector<8xf32> to vector<8x1xf32>
    %9 = vector.broadcast %8 : vector<8x1xf32> to vector<8x128xf32>
    %10 = arith.cmpf ole, %5, %9 : vector<8x128xf32>
    %c2147483647_i32 = arith.constant 2147483647 : i32
    %11 = vector.broadcast %c2147483647_i32 : i32 to vector<8x128xi32>
    %12 = arith.select %10, %6, %11 : vector<8x128xi1>, vector<8x128xi32>
    %cst_6 = arith.constant dense<2147483647> : vector<8xi32>
    %13 = vector.multi_reduction <minsi>, %12, %cst_6 [1] : vector<8x128xi32> to vector<8xi32>
    %14 = vector.shape_cast %13 : vector<8xi32> to vector<8x1xi32>
    %15 = vector.broadcast %14 : vector<8x1xi32> to vector<8x128xi32>
    %16 = arith.cmpi eq, %6, %15 : vector<8x128xi32>
    %17 = arith.extui %16 : vector<8x128xi1> to vector<8x128xi32>
    %18 = arith.sitofp %17 : vector<8x128xi32> to vector<8x128xf32>
    %c0_7 = arith.constant 0 : index
    %c0_8 = arith.constant 0 : index
    %19 = vector.load %arg4[%c0_7, %c0_8] : memref<128x128xf32, #tpu.memory_space<vmem>>, vector<128x128xf32>
    %cst_9 = arith.constant dense<0.000000e+00> : vector<8x128xf32>
    %20 = tpu.matmul %18, %19, %cst_9 {dimension_numbers = #tpu.dot_dimension_numbers<[1], [0], [0], [1], [0, 0, 1, 1], [], []>} : vector<8x128xf32>, vector<128x128xf32>, vector<8x128xf32> -> vector<8x128xf32>
    %21 = arith.subf %20, %0 : vector<8x128xf32>
    %22 = arith.addf %0, %21 : vector<8x128xf32>
    %c0_10 = arith.constant 0 : index
    %c0_11 = arith.constant 0 : index
    %23 = vector.load %arg5[%c0_10, %c0_11] : memref<8x128xf32, #tpu.memory_space<vmem>>, vector<8x128xf32>
    tpu.vector_store %arg5[%c0_10, %c0_11], %22 {strides = array<i32>} : memref<8x128xf32, #tpu.memory_space<vmem>>, vector<8x128xf32>,
    %24 = tpu.iota {dimensions = array<i32: 0>} : vector<8x1xi32>
    %c8_i32 = arith.constant 8 : i32
    %25 = arith.muli %arg0, %c8_i32 : i32
    %26 = vector.broadcast %25 : i32 to vector<8x1xi32>
    %27 = arith.addi %24, %26 : vector<8x1xi32>
    %c16_i32 = arith.constant 16 : i32
    %28 = vector.broadcast %c16_i32 : i32 to vector<8x1xi32>
    %29 = arith.cmpi slt, %27, %28 : vector<8x1xi32>
    %30 = arith.extui %29 : vector<8x1xi1> to vector<8x1xi32>
    %31 = arith.sitofp %30 : vector<8x1xi32> to vector<8x1xf32>
    %32 = arith.mulf %21, %21 : vector<8x128xf32>
    %33 = vector.broadcast %31 : vector<8x1xf32> to vector<8x128xf32>
    %34 = arith.mulf %32, %33 : vector<8x128xf32>
    %35 = vector.shape_cast %34 : vector<8x128xf32> to vector<1x8x128xf32>
    %cst_12 = arith.constant dense<0.000000e+00> : vector<1xf32>
    %36 = vector.multi_reduction <add>, %35, %cst_12 [1, 2] : vector<1x8x128xf32> to vector<1xf32>
    %37 = vector.shape_cast %36 : vector<1xf32> to vector<1x1x1xf32>
    %38 = vector.extract %37[0, 0, 0] : f32 from vector<1x1x1xf32>
    %39 = vector.broadcast %38 : f32 to vector<8x128xf32>
    %c0_13 = arith.constant 0 : index
    %c0_14 = arith.constant 0 : index
    %40 = vector.load %arg6[%c0_13, %c0_14] : memref<8x128xf32, #tpu.memory_space<vmem>>, vector<8x128xf32>
    tpu.vector_store %arg6[%c0_13, %c0_14], %39 {strides = array<i32>} : memref<8x128xf32, #tpu.memory_space<vmem>>, vector<8x128xf32>,
    return
  }
  func.func @transform_0(%arg0: i32) -> (i32, i32) {
    %c0_i32 = arith.constant 0 : i32
    %c0_i32_0 = arith.constant 0 : i32
    return %arg0, %c0_i32 : i32, i32
  }
  func.func @transform_1(%arg0: i32) -> (i32, i32) {
    %c0_i32 = arith.constant 0 : i32
    %c0_i32_0 = arith.constant 0 : i32
    %c0_i32_1 = arith.constant 0 : i32
    return %c0_i32, %c0_i32_0 : i32, i32
  }
  func.func @transform_2(%arg0: i32) -> (i32, i32) {
    %c0_i32 = arith.constant 0 : i32
    %c0_i32_0 = arith.constant 0 : i32
    %c0_i32_1 = arith.constant 0 : i32
    return %c0_i32, %c0_i32_0 : i32, i32
  }
  func.func @transform_3(%arg0: i32) -> (i32, i32) {
    %c0_i32 = arith.constant 0 : i32
    %c0_i32_0 = arith.constant 0 : i32
    %c0_i32_1 = arith.constant 0 : i32
    return %c0_i32, %c0_i32_0 : i32, i32
  }
  func.func @transform_4(%arg0: i32) -> (i32, i32) {
    %c0_i32 = arith.constant 0 : i32
    %c0_i32_0 = arith.constant 0 : i32
    return %arg0, %c0_i32 : i32, i32
  }
  func.func @transform_5(%arg0: i32) -> (i32, i32) {
    %c0_i32 = arith.constant 0 : i32
    %c0_i32_0 = arith.constant 0 : i32
    return %arg0, %c0_i32 : i32, i32
  }
}

</mosaic_0001>

<llo_original>
// kernel: vector_quantizer_forward.1
$region0: #{vector_quantizer_forward.1}
  #allocation0 [shape = 'u32[]', space=smem, size = 0x4, offset = 0x4, fixed_abs, tag = 'smem constant byte address 0x4 - core index']
  #allocation1 [shape = 'u32[144,128]{1,0:T(1,128)}', space=vmem, size = 0x12000, scoped, tag = 'internal scratch']
  %s0 = inlined_call_operand.vmem [shape: f32[16,128], index: 0, kind: input, shape index: {}]
  %s1 = inlined_call_operand.vmem [shape: f32[128,128], index: 1, kind: input, shape index: {}]
  %s2 = inlined_call_operand.vmem [shape: f32[1,128], index: 2, kind: input, shape index: {}]
  %s3 = inlined_call_operand.vmem [shape: f32[128,128], index: 3, kind: input, shape index: {}]
  %s4 = inlined_call_operand.vmem [shape: f32[16,128], index: 4, kind: output, shape index: {0}]
  %s5 = inlined_call_operand.vmem [shape: f32[16,128], index: 5, kind: output, shape index: {1}]
  %6 = xla_tuple %s4, %s5
  %s7 = sld [smem:[#allocation0]]
  $region57: #{vector_quantizer_forward.1} parent=0
    _
  %s9 = ssub.s32 1, %s7
  %s10 = scalar_select 0, %s9, %s7
  loop: start=0, step=1, limit=4
  $region2: #{vector_quantizer_forward.1} parent=0 // loop_pre_header
    _
  $region3: #{vector_quantizer_forward.1} parent=0 // loop_header
    %s12 = sphi 0, %s16
    %p13 = scmp.ge.s32.totalorder %s12, 4
    %s22 = sphi 0, %s24
    %s25 = sphi 0, %s22
    %s26 = sphi 0, %s25
    %s42 = sphi 0, %s26
    %s46 = sphi 0, %s46
    %s48 = sphi 0, %s46
    %s49 = sphi 0, %s48
    %s63 = sphi 0, %s49
    %s67 = sphi 0, %s67
    %s69 = sphi 0, %s67
    %s70 = sphi 0, %s69
    %s84 = sphi 0, %s70
    %s88 = sphi 0, %s88
    %s90 = sphi 0, %s88
    %s91 = sphi 0, %s90
    %s105 = sphi 0, %s91
    %s111 = sphi 0, %s113
    %s114 = sphi 0, %s111
    %s115 = sphi 0, %s114
    %s131 = sphi 0, %s115
    %s137 = sphi 0, %s139
    %s140 = sphi 0, %s137
    %s141 = sphi 0, %s140
    %s157 = sphi 0, %s141
  $region4: #{vector_quantizer_forward.1} parent=0 // loop_header_branch
    %15 = sbr.rel (%p13) target = $region8
  $region5: #{vector_quantizer_forward.1} parent=0 // loop_body
    %s17 = ssub.s32 %s12, 1
    %s18 = ssub.s32 %s12, 2
    %s19 = sadd.s32 %s12, 1
    %s20 = ssub.s32 %s12, %s19
    %p21 = scmp.eq.s32.totalorder %s20, 0
    %s23 = sadd.s32 %s22, 1
    %s24 = scalar_select %p21, %s22, %s23
    %p27 = pneg %p21
    %p28 = scmp.eq.s32.totalorder %s12, 1
    %p29 = por %p27, %p28
    %p30 = scmp.ne.s32.totalorder %s22, %s25
    %p31 = scmp.eq.s32.totalorder %s12, 0
    %p32 = por %p30, %p31
    %p33 = scmp.ne.s32.totalorder %s22, %s25
    %p34 = scmp.eq.s32.totalorder %s17, 1
    %p35 = por %p33, %p34
    %p36 = scmp.ne.s32.totalorder %s25, %s26
    %p37 = scmp.eq.s32.totalorder %s17, 0
    %p38 = por %p36, %p37
    %p39 = scmp.ne.s32.totalorder %s25, %s26
    %p40 = scmp.eq.s32.totalorder %s18, 1
    %p41 = por %p39, %p40
    %p43 = scmp.ne.s32.totalorder %s26, %s42
    %p44 = scmp.eq.s32.totalorder %s18, 0
    %p45 = por %p43, %p44
    %s47 = sadd.s32 %s46, 1
    %p50 = scmp.eq.s32.totalorder %s12, 1
    %p51 = scmp.ne.s32.totalorder %s46, %s48
    %p52 = scmp.eq.s32.totalorder %s12, 0
    %p53 = por %p51, %p52
    %p54 = scmp.ne.s32.totalorder %s46, %s48
    %p55 = scmp.eq.s32.totalorder %s17, 1
    %p56 = por %p54, %p55
    %p57 = scmp.ne.s32.totalorder %s48, %s49
    %p58 = scmp.eq.s32.totalorder %s17, 0
    %p59 = por %p57, %p58
    %p60 = scmp.ne.s32.totalorder %s48, %s49
    %p61 = scmp.eq.s32.totalorder %s18, 1
    %p62 = por %p60, %p61
    %p64 = scmp.ne.s32.totalorder %s49, %s63
    %p65 = scmp.eq.s32.totalorder %s18, 0
    %p66 = por %p64, %p65
    %s68 = sadd.s32 %s67, 1
    %p71 = scmp.eq.s32.totalorder %s12, 1
    %p72 = scmp.ne.s32.totalorder %s67, %s69
    %p73 = scmp.eq.s32.totalorder %s12, 0
    %p74 = por %p72, %p73
    %p75 = scmp.ne.s32.totalorder %s67, %s69
    %p76 = scmp.eq.s32.totalorder %s17, 1
    %p77 = por %p75, %p76
    %p78 = scmp.ne.s32.totalorder %s69, %s70
    %p79 = scmp.eq.s32.totalorder %s17, 0
    %p80 = por %p78, %p79
    %p81 = scmp.ne.s32.totalorder %s69, %s70
    %p82 = scmp.eq.s32.totalorder %s18, 1
    %p83 = por %p81, %p82
    %p85 = scmp.ne.s32.totalorder %s70, %s84
    %p86 = scmp.eq.s32.totalorder %s18, 0
    %p87 = por %p85, %p86
    %s89 = sadd.s32 %s88, 1
    %p92 = scmp.eq.s32.totalorder %s12, 1
    %p93 = scmp.ne.s32.totalorder %s88, %s90
    %p94 = scmp.eq.s32.totalorder %s12, 0
    %p95 = por %p93, %p94
    %p96 = scmp.ne.s32.totalorder %s88, %s90
    %p97 = scmp.eq.s32.totalorder %s17, 1
    %p98 = por %p96, %p97
    %p99 = scmp.ne.s32.totalorder %s90, %s91
    %p100 = scmp.eq.s32.totalorder %s17, 0
    %p101 = por %p99, %p100
    %p102 = scmp.ne.s32.totalorder %s90, %s91
    %p103 = scmp.eq.s32.totalorder %s18, 1
    %p104 = por %p102, %p103
    %p106 = scmp.ne.s32.totalorder %s91, %s105
    %p107 = scmp.eq.s32.totalorder %s18, 0
    %p108 = por %p106, %p107
    %s109 = ssub.s32 %s12, %s19
    %p110 = scmp.eq.s32.totalorder %s109, 0
    %s112 = sadd.s32 %s111, 1
    %s113 = scalar_select %p110, %s111, %s112
    %p116 = pneg %p110
    %p117 = scmp.eq.s32.totalorder %s12, 1
    %p118 = por %p116, %p117
    %p119 = scmp.ne.s32.totalorder %s111, %s114
    %p120 = scmp.eq.s32.totalorder %s12, 0
    %p121 = por %p119, %p120
    %p122 = scmp.ne.s32.totalorder %s111, %s114
    %p123 = scmp.eq.s32.totalorder %s17, 1
    %p124 = por %p122, %p123
    %p125 = scmp.ne.s32.totalorder %s114, %s115
    %p126 = scmp.eq.s32.totalorder %s17, 0
    %p127 = por %p125, %p126
    %p128 = scmp.ne.s32.totalorder %s114, %s115
    %p129 = scmp.eq.s32.totalorder %s18, 1
    %p130 = por %p128, %p129
    %p132 = scmp.ne.s32.totalorder %s115, %s131
    %p133 = scmp.eq.s32.totalorder %s18, 0
    %p134 = por %p132, %p133
    %s135 = ssub.s32 %s12, %s19
    %p136 = scmp.eq.s32.totalorder %s135, 0
    %s138 = sadd.s32 %s137, 1
    %s139 = scalar_select %p136, %s137, %s138
    %p142 = pneg %p136
    %p143 = scmp.eq.s32.totalorder %s12, 1
    %p144 = por %p142, %p143
    %p145 = scmp.ne.s32.totalorder %s137, %s140
    %p146 = scmp.eq.s32.totalorder %s12, 0
    %p147 = por %p145, %p146
    %p148 = scmp.ne.s32.totalorder %s137, %s140
    %p149 = scmp.eq.s32.totalorder %s17, 1
    %p150 = por %p148, %p149
    %p151 = scmp.ne.s32.totalorder %s140, %s141
    %p152 = scmp.eq.s32.totalorder %s17, 0
    %p153 = por %p151, %p152
    %p154 = scmp.ne.s32.totalorder %s140, %s141
    %p155 = scmp.eq.s32.totalorder %s18, 1
    %p156 = por %p154, %p155
    %p158 = scmp.ne.s32.totalorder %s141, %s157
    %p159 = scmp.eq.s32.totalorder %s18, 0
    %p160 = por %p158, %p159
    %p161 = scmp.le.s32.totalorder 1, %s12
    %p162 = scmp.lt.s32.totalorder %s12, 3
    %p163 = pnand %p161, %p162
    %p164 = pneg %p163
    // Predicated region
    $region9: #{vector_quantizer_forward.1} parent=5 // pred_check
      _
    $region10: #{vector_quantizer_forward.1} parent=5 // pred_check_branch
      %166 = sbr.rel (%p163) target = $region12
    $region11: #{vector_quantizer_forward.1} parent=5 // pred_region
      %s167 = ssub.s32 %s12, 1
      // Predicated region
      $region13: #{vector_quantizer_forward.1} parent=11 // pred_check
        %p168 = pneg %p59
      $region14: #{vector_quantizer_forward.1} parent=11 // pred_check_branch
        %170 = sbr.rel (%p168) target = $region16
      $region15: #{vector_quantizer_forward.1} parent=11 // pred_region
        _
      $region16: #{vector_quantizer_forward.1} parent=11 // pred_fallthru
        _
      // Predicated region
      $region17: #{vector_quantizer_forward.1} parent=11 // pred_check
        %p171 = pneg %p80
      $region18: #{vector_quantizer_forward.1} parent=11 // pred_check_branch
        %173 = sbr.rel (%p171) target = $region20
      $region19: #{vector_quantizer_forward.1} parent=11 // pred_region
        _
      $region20: #{vector_quantizer_forward.1} parent=11 // pred_fallthru
        _
      // Predicated region
      $region21: #{vector_quantizer_forward.1} parent=11 // pred_check
        %p174 = pneg %p101
      $region22: #{vector_quantizer_forward.1} parent=11 // pred_check_branch
        %176 = sbr.rel (%p174) target = $region24
      $region23: #{vector_quantizer_forward.1} parent=11 // pred_region
        _
      $region24: #{vector_quantizer_forward.1} parent=11 // pred_fallthru
        _
    $region12: #{vector_quantizer_forward.1} parent=5 // pred_fallthru
      _
    %p177 = scmp.lt.s32.totalorder %s12, 2
    // Predicated region
    $region25: #{vector_quantizer_forward.1} parent=5 // pred_check
      %p178 = pneg %p177
    $region26: #{vector_quantizer_forward.1} parent=5 // pred_check_branch
      %180 = sbr.rel (%p178) target = $region28
    $region27: #{vector_quantizer_forward.1} parent=5 // pred_region
      // Predicated region
      $region29: #{vector_quantizer_forward.1} parent=27 // pred_check
        %p181 = pneg %p32
      $region30: #{vector_quantizer_forward.1} parent=27 // pred_check_branch
        %183 = sbr.rel (%p181) target = $region32
      $region31: #{vector_quantizer_forward.1} parent=27 // pred_region
        %p184 = scmp.lt.s32.totalorder %s12, 1
        %s185 = scalar_select %p184, %s12, 1
        %s186 = smul.addr %s185, 8
        %s187 = scalar_lea.vmem %s0, %s186
      $region32: #{vector_quantizer_forward.1} parent=27 // pred_fallthru
        _
    $region28: #{vector_quantizer_forward.1} parent=5 // pred_fallthru
      _
    %p188 = scmp.le.s32.totalorder 1, %s12
    %p189 = scmp.lt.s32.totalorder %s12, 3
    %p190 = pnand %p188, %p189
    %p191 = pneg %p190
    // Predicated region
    $region33: #{vector_quantizer_forward.1} parent=5 // pred_check
      _
    $region34: #{vector_quantizer_forward.1} parent=5 // pred_check_branch
      %193 = sbr.rel (%p190) target = $region36
    $region35: #{vector_quantizer_forward.1} parent=5 // pred_region
      %s194 = ssub.s32 %s12, 1
      %p195 = scmp.lt.s32.totalorder %s17, 1
      %s196 = scalar_select %p195, %s17, 1
      %s197 = smul.addr %s196, 8
      %s198 = scalar_lea.vmem %s0, %s197
      %p199 = pneg %p38
      %p200 = pneg %p35
      %p201 = pneg %p59
      %p202 = pneg %p56
      %p203 = pneg %p80
      %p204 = pneg %p77
      %p205 = pneg %p101
      %p206 = pneg %p98
      %p207 = pneg %p127
      %p208 = pneg %p124
      %p209 = scmp.lt.s32.totalorder %s17, 1
      %s210 = scalar_select %p209, %s17, 1
      %s211 = smul.addr %s210, 8
      %s212 = scalar_lea.vmem %s4, %s211
      %p213 = pneg %p153
      %p214 = pneg %p150
      %p215 = scmp.lt.s32.totalorder %s17, 1
      %s216 = scalar_select %p215, %s17, 1
      %s217 = smul.addr %s216, 8
      %s218 = scalar_lea.vmem %s5, %s217
      %p219 = scmp.lt.s32.totalorder %s17, 1
      %s220 = scalar_select %p219, %s17, 1
      %s221 = smul.addr %s220, 8
      %s222 = scalar_lea.vmem %s0, %s221
      %p223 = scmp.lt.s32.totalorder %s17, 1
      %s224 = scalar_select %p223, %s17, 1
      %s225 = smul.addr %s224, 8
      %s226 = scalar_lea.vmem %s4, %s225
      %p227 = scmp.lt.s32.totalorder %s17, 1
      %s228 = scalar_select %p227, %s17, 1
      %s229 = smul.addr %s228, 8
      %s230 = scalar_lea.vmem %s5, %s229
      %v231 = vld [vmem:[%s222] sm:$0xff]
      %v232 = vld [vmem:[%s1] sm:$0xff]
      %v233 = vld [vmem:[%s1 + $0x8] sm:$0xff]
      %v234 = vld [vmem:[%s1 + $0x10] sm:$0xff]
      %v235 = vld [vmem:[%s1 + $0x18] sm:$0xff]
      %v236 = vld [vmem:[%s1 + $0x20] sm:$0xff]
      %v237 = vld [vmem:[%s1 + $0x28] sm:$0xff]
      %v238 = vld [vmem:[%s1 + $0x30] sm:$0xff]
      %v239 = vld [vmem:[%s1 + $0x38] sm:$0xff]
      %v240 = vld [vmem:[%s1 + $0x40] sm:$0xff]
      %v241 = vld [vmem:[%s1 + $0x48] sm:$0xff]
      %v242 = vld [vmem:[%s1 + $0x50] sm:$0xff]
      %v243 = vld [vmem:[%s1 + $0x58] sm:$0xff]
      %v244 = vld [vmem:[%s1 + $0x60] sm:$0xff]
      %v245 = vld [vmem:[%s1 + $0x68] sm:$0xff]
      %v246 = vld [vmem:[%s1 + $0x70] sm:$0xff]
      %v247 = vld [vmem:[%s1 + $0x78] sm:$0xff]
      %248 = vmatprep.subr.mxu0 0.0
      %249 = vmatpush1.msra.mxu0 %v247
      %250 = vmatprep.subr.mxu0 0.0
      %251 = vmatpush1.msra.mxu0 %v246
      %252 = vmatprep.subr.mxu0 0.0
      %253 = vmatpush1.msra.mxu0 %v245
      %254 = vmatprep.subr.mxu0 0.0
      %255 = vmatpush1.msra.mxu0 %v244
      %256 = vmatprep.subr.mxu0 0.0
      %257 = vmatpush1.msra.mxu0 %v243
      %258 = vmatprep.subr.mxu0 0.0
      %259 = vmatpush1.msra.mxu0 %v242
      %260 = vmatprep.subr.mxu0 0.0
      %261 = vmatpush1.msra.mxu0 %v241
      %262 = vmatprep.subr.mxu0 0.0
      %263 = vmatpush1.msra.mxu0 %v240
      %264 = vmatprep.subr.mxu0 0.0
      %265 = vmatpush1.msra.mxu0 %v239
      %266 = vmatprep.subr.mxu0 0.0
      %267 = vmatpush1.msra.mxu0 %v238
      %268 = vmatprep.subr.mxu0 0.0
      %269 = vmatpush1.msra.mxu0 %v237
      %270 = vmatprep.subr.mxu0 0.0
      %271 = vmatpush1.msra.mxu0 %v236
      %272 = vmatprep.subr.mxu0 0.0
      %273 = vmatpush1.msra.mxu0 %v235
      %274 = vmatprep.subr.mxu0 0.0
      %275 = vmatpush1.msra.mxu0 %v234
      %276 = vmatprep.subr.mxu0 0.0
      %277 = vmatpush1.msra.mxu0 %v233
      %278 = vmatprep.subr.mxu0 0.0
      %279 = vmatpush1.msra.mxu0 %v232
      %280 = vmatprep.subr.mxu0 0.0
      %281 = vmatpush2.msra.mxu0 0.0
      %282 = vmatprep.subr.mxu0 0.0
      %283 = vmatpush2.msra.mxu0 0.0
      %284 = vmatprep.subr.mxu0 0.0
      %285 = vmatpush2.msra.mxu0 0.0
      %286 = vmatprep.subr.mxu0 0.0
      %287 = vmatpush2.msra.mxu0 0.0
      %288 = vmatprep.subr.mxu0 0.0
      %289 = vmatpush2.msra.mxu0 0.0
      %290 = vmatprep.subr.mxu0 0.0
      %291 = vmatpush2.msra.mxu0 0.0
      %292 = vmatprep.subr.mxu0 0.0
      %293 = vmatpush2.msra.mxu0 0.0
      %294 = vmatprep.subr.mxu0 0.0
      %295 = vmatpush2.msra.mxu0 0.0
      %296 = vmatprep.subr.mxu0 0.0
      %297 = vmatpush2.msra.mxu0 0.0
      %298 = vmatprep.subr.mxu0 0.0
      %299 = vmatpush2.msra.mxu0 0.0
      %300 = vmatprep.subr.mxu0 0.0
      %301 = vmatpush2.msra.mxu0 0.0
      %302 = vmatprep.subr.mxu0 0.0
      %303 = vmatpush2.msra.mxu0 0.0
      %304 = vmatprep.subr.mxu0 0.0
      %305 = vmatpush2.msra.mxu0 0.0
      %306 = vmatprep.subr.mxu0 0.0
      %307 = vmatpush2.msra.mxu0 0.0
      %308 = vmatprep.subr.mxu0 0.0
      %309 = vmatpush2.msra.mxu0 0.0
      %310 = vmatprep.subr.mxu0 0.0
      %311 = vmatpush2.msra.mxu0 0.0
      %312 = vmatprep.mubr.f32.mxu0 0.0
      %313 = vmatmul.mubr.f32.gmra.mxu0 %v231
      %v314 = vpop.f32.mrf.mxu0
      %v315 = vadd.f32 0.0, %v314
      %v316 = vpop.f32.mrf.mxu0
      %317 = vdwg.mxu0
      %v318 = vld [vmem:[%s2] sm:$0x1]
      %v320 = vlaneseq
      %v321 = vshrl.u32 %v320, 7
      %v322 = vsub.s32 0, %v321
      %v323 = vrot.slane %v318, %v322
      %v325 = vadd.f32 %v323, %v315
      %v326 = vlaneseq
      %v327 = vand.u32 %v326, 127
      %328 = vmin.xlane.f32.xlu0 %v325
      %v329 = vpop.xlane.xlu0 %328
      %vm330 = vcmp.le.f32.partialorder %v325, %v329
      %v331 = vsel %vm330, %v327, 2147483647
      %v332 = vand.u32 %v331, 65535
      %v333 = vshra.s32 %v331, 16
      %v334 = vcvt.s32.f32 %v332
      %v335 = vcvt.s32.f32 %v333
      %336 = vmin.xlane.f32.xlu0 %v335
      %v337 = vpop.xlane.xlu0 %336
      %vm338 = vcmp.eq.f32.partialorder %v335, %v337
      %v339 = vsel %vm338, %v334, inf
      %340 = vmin.xlane.f32.xlu0 %v339
      %v341 = vpop.xlane.xlu0 %340
      %v342 = vcvt.f32.s32 %v341
      %v343 = vcvt.f32.s32 %v337
      %v344 = vshll.u32 %v343, 16
      %v345 = vadd.s32 %v344, %v342
      %vm346 = vcmp.eq.s32.totalorder %v327, %v345
      %v347 = vsel %vm346, 1, 0
      %v348 = vcvt.s32.f32 %v347
      %v349 = vld [vmem:[%s3] sm:$0xff]
      %v350 = vld [vmem:[%s3 + $0x8] sm:$0xff]
      %v351 = vld [vmem:[%s3 + $0x10] sm:$0xff]
      %v352 = vld [vmem:[%s3 + $0x18] sm:$0xff]
      %v353 = vld [vmem:[%s3 + $0x20] sm:$0xff]
      %v354 = vld [vmem:[%s3 + $0x28] sm:$0xff]
      %v355 = vld [vmem:[%s3 + $0x30] sm:$0xff]
      %v356 = vld [vmem:[%s3 + $0x38] sm:$0xff]
      %v357 = vld [vmem:[%s3 + $0x40] sm:$0xff]
      %v358 = vld [vmem:[%s3 + $0x48] sm:$0xff]
      %v359 = vld [vmem:[%s3 + $0x50] sm:$0xff]
      %v360 = vld [vmem:[%s3 + $0x58] sm:$0xff]
      %v361 = vld [vmem:[%s3 + $0x60] sm:$0xff]
      %v362 = vld [vmem:[%s3 + $0x68] sm:$0xff]
      %v363 = vld [vmem:[%s3 + $0x70] sm:$0xff]
      %v364 = vld [vmem:[%s3 + $0x78] sm:$0xff]
      %365 = vmatprep.subr.mxu0 0.0
      %366 = vmatpush1.msra.mxu0 %v364
      %367 = vmatprep.subr.mxu0 0.0
      %368 = vmatpush1.msra.mxu0 %v363
      %369 = vmatprep.subr.mxu0 0.0
      %370 = vmatpush1.msra.mxu0 %v362
      %371 = vmatprep.subr.mxu0 0.0
      %372 = vmatpush1.msra.mxu0 %v361
      %373 = vmatprep.subr.mxu0 0.0
      %374 = vmatpush1.msra.mxu0 %v360
      %375 = vmatprep.subr.mxu0 0.0
      %376 = vmatpush1.msra.mxu0 %v359
      %377 = vmatprep.subr.mxu0 0.0
      %378 = vmatpush1.msra.mxu0 %v358
      %379 = vmatprep.subr.mxu0 0.0
      %380 = vmatpush1.msra.mxu0 %v357
      %381 = vmatprep.subr.mxu0 0.0
      %382 = vmatpush1.msra.mxu0 %v356
      %383 = vmatprep.subr.mxu0 0.0
      %384 = vmatpush1.msra.mxu0 %v355
      %385 = vmatprep.subr.mxu0 0.0
      %386 = vmatpush1.msra.mxu0 %v354
      %387 = vmatprep.subr.mxu0 0.0
      %388 = vmatpush1.msra.mxu0 %v353
      %389 = vmatprep.subr.mxu0 0.0
      %390 = vmatpush1.msra.mxu0 %v352
      %391 = vmatprep.subr.mxu0 0.0
      %392 = vmatpush1.msra.mxu0 %v351
      %393 = vmatprep.subr.mxu0 0.0
      %394 = vmatpush1.msra.mxu0 %v350
      %395 = vmatprep.subr.mxu0 0.0
      %396 = vmatpush1.msra.mxu0 %v349
      %397 = vmatprep.subr.mxu0 0.0
      %398 = vmatpush2.msra.mxu0 0.0
      %399 = vmatprep.subr.mxu0 0.0
      %400 = vmatpush2.msra.mxu0 0.0
      %401 = vmatprep.subr.mxu0 0.0
      %402 = vmatpush2.msra.mxu0 0.0
      %403 = vmatprep.subr.mxu0 0.0
      %404 = vmatpush2.msra.mxu0 0.0
      %405 = vmatprep.subr.mxu0 0.0
      %406 = vmatpush2.msra.mxu0 0.0
      %407 = vmatprep.subr.mxu0 0.0
      %408 = vmatpush2.msra.mxu0 0.0
      %409 = vmatprep.subr.mxu0 0.0
      %410 = vmatpush2.msra.mxu0 0.0
      %411 = vmatprep.subr.mxu0 0.0
      %412 = vmatpush2.msra.mxu0 0.0
      %413 = vmatprep.subr.mxu0 0.0
      %414 = vmatpush2.msra.mxu0 0.0
      %415 = vmatprep.subr.mxu0 0.0
      %416 = vmatpush2.msra.mxu0 0.0
      %417 = vmatprep.subr.mxu0 0.0
      %418 = vmatpush2.msra.mxu0 0.0
      %419 = vmatprep.subr.mxu0 0.0
      %420 = vmatpush2.msra.mxu0 0.0
      %421 = vmatprep.subr.mxu0 0.0
      %422 = vmatpush2.msra.mxu0 0.0
      %423 = vmatprep.subr.mxu0 0.0
      %424 = vmatpush2.msra.mxu0 0.0
      %425 = vmatprep.subr.mxu0 0.0
      %426 = vmatpush2.msra.mxu0 0.0
      %427 = vmatprep.subr.mxu0 0.0
      %428 = vmatpush2.msra.mxu0 0.0
      %429 = vmatprep.mubr.f32.mxu0 0.0
      %430 = vmatmul.mubr.f32.gmra.mxu0 %v348
      %v431 = vpop.f32.mrf.mxu0
      %v432 = vadd.f32 0.0, %v431
      %v433 = vpop.f32.mrf.mxu0
      %434 = vdwg.mxu0
      %v435 = vsub.f32 %v432, %v231
      %v436 = vadd.f32 %v231, %v435
      %437 = vst [vmem:[%s226] sm:$0xff] %v436
      %v438 = vlaneseq
      %v439 = vshrl.u32 %v438, 7
      %s440 = smul.u32 %s17, 8
      %v441 = vstv %s440
      %v442 = vadd.s32 %v439, %v441
      %vm443 = vcmp.lt.s32.totalorder %v442, 16
      %v444 = vsel %vm443, 1, 0
      %v445 = vcvt.s32.f32 %v444
      %v446 = vmul.f32 %v435, %v435
      %v447 = vmul.f32 %v446, %v445
      %448 = vadd.xlane.f32.xlu0 %v447
      %v449 = vpop.xlane.xlu0 %448
      %v450 = vrot.slane %v449, 4
      %v451 = vadd.f32 %v449, %v450
      %v452 = vrot.slane %v451, 2
      %v453 = vadd.f32 %v451, %v452
      %v454 = vrot.slane %v453, 1
      %v455 = vadd.f32 %v453, %v454
      %s456 = vtos %v455
      %v457 = vstv %s456
      %458 = vst [vmem:[%s230] sm:$0xff] %v457
      %p459 = scmp.lt.s32.totalorder %s17, 1
      %s460 = scalar_select %p459, %s17, 1
      %s461 = smul.addr %s460, 8
      %s462 = scalar_lea.vmem %s4, %s461
      %p463 = scmp.lt.s32.totalorder %s17, 1
      %s464 = scalar_select %p463, %s17, 1
      %s465 = smul.addr %s464, 8
      %s466 = scalar_lea.vmem %s5, %s465
      // Predicated region
      $region37: #{vector_quantizer_forward.1} parent=35 // pred_check
        %p467 = pneg %p124
      $region38: #{vector_quantizer_forward.1} parent=35 // pred_check_branch
        %469 = sbr.rel (%p467) target = $region40
      $region39: #{vector_quantizer_forward.1} parent=35 // pred_region
        _
      $region40: #{vector_quantizer_forward.1} parent=35 // pred_fallthru
        _
      // Predicated region
      $region41: #{vector_quantizer_forward.1} parent=35 // pred_check
        %p470 = pneg %p150
      $region42: #{vector_quantizer_forward.1} parent=35 // pred_check_branch
        %472 = sbr.rel (%p470) target = $region44
      $region43: #{vector_quantizer_forward.1} parent=35 // pred_region
        _
      $region44: #{vector_quantizer_forward.1} parent=35 // pred_fallthru
        _
    $region36: #{vector_quantizer_forward.1} parent=5 // pred_fallthru
      _
    %p473 = scmp.le.s32.totalorder 2, %s12
    // Predicated region
    $region45: #{vector_quantizer_forward.1} parent=5 // pred_check
      %p474 = pneg %p473
    $region46: #{vector_quantizer_forward.1} parent=5 // pred_check_branch
      %476 = sbr.rel (%p474) target = $region48
    $region47: #{vector_quantizer_forward.1} parent=5 // pred_region
      %s477 = ssub.s32 %s12, 2
      // Predicated region
      $region49: #{vector_quantizer_forward.1} parent=47 // pred_check
        %p478 = pneg %p130
      $region50: #{vector_quantizer_forward.1} parent=47 // pred_check_branch
        %480 = sbr.rel (%p478) target = $region52
      $region51: #{vector_quantizer_forward.1} parent=47 // pred_region
        %p481 = scmp.lt.s32.totalorder %s18, 1
        %s482 = scalar_select %p481, %s18, 1
        %s483 = smul.addr %s482, 8
        %s484 = scalar_lea.vmem %s4, %s483
      $region52: #{vector_quantizer_forward.1} parent=47 // pred_fallthru
        _
      // Predicated region
      $region53: #{vector_quantizer_forward.1} parent=47 // pred_check
        %p485 = pneg %p156
      $region54: #{vector_quantizer_forward.1} parent=47 // pred_check_branch
        %487 = sbr.rel (%p485) target = $region56
      $region55: #{vector_quantizer_forward.1} parent=47 // pred_region
        %p488 = scmp.lt.s32.totalorder %s18, 1
        %s489 = scalar_select %p488, %s18, 1
        %s490 = smul.addr %s489, 8
        %s491 = scalar_lea.vmem %s5, %s490
      $region56: #{vector_quantizer_forward.1} parent=47 // pred_fallthru
        _
    $region48: #{vector_quantizer_forward.1} parent=5 // pred_fallthru
      _
  $region6: #{vector_quantizer_forward.1} parent=0 // loop_footer
    %s16 = sadd.s32 1, %s12
  $region7: #{vector_quantizer_forward.1} parent=0 // loop_footer_branch
    %11 = sbr.rel target = $region3
  $region8: #{vector_quantizer_forward.1} parent=0 // loop_exit
    _

</llo_original>
